<compile_context>
chip_gen: v7x
topology: tpu7x:2x2x1
jax: 0.10.0
libtpu: 0.0.40
codegen_flags: <defaults>
</compile_context>

<pallas_src>
import functools

import jax
import jax.numpy as jnp
from jax import lax
from jax.experimental import pallas as pl
from jax.experimental.pallas import tpu as pltpu


# --------------------------------------------------------------------------- #
# Kernel bodies
# --------------------------------------------------------------------------- #
def _fused_kernel(x_ref, w1t_ref, b1_ref, w2t_ref, b2_ref, o_ref, *, inv_t):
    """Grid: (B,) 'parallel'.  One resident (1, C, T) row: pool + MLP + scale."""
    xb = x_ref[...].astype(jnp.float32)                       # (1, C, T)
    mean = jnp.sum(xb, axis=-1) * jnp.float32(inv_t)          # (1, C)
    # fc1 (standard-form contraction; weights pre-transposed in the wrapper).
    h = jnp.dot(mean, w1t_ref[...], preferred_element_type=jnp.float32)
    h = jnp.maximum(h + b1_ref[...], 0.0)                     # (1, H)
    # fc2.
    s = jnp.dot(h, w2t_ref[...], preferred_element_type=jnp.float32)
    gate = jax.nn.sigmoid(s + b2_ref[...])                    # (1, C)
    o_ref[...] = (xb * gate[:, :, None]).astype(o_ref.dtype)  # broadcast over T


def _pool_kernel(x_ref, sum_ref, *, T, tile_t):
    """Grid: (num_bc, num_t).  Accumulates per-row sums into the resident output."""
    t = pl.program_id(1)

    @pl.when(t == 0)
    def _():
        sum_ref[...] = jnp.zeros_like(sum_ref)

    if T % tile_t != 0:
        last = pl.num_programs(1) - 1

        @pl.when(t != last)
        def _():
            sum_ref[...] += jnp.sum(
                x_ref[...].astype(jnp.float32), axis=-1, keepdims=True)

        @pl.when(t == last)
        def _():
            xb = x_ref[...].astype(jnp.float32)
            col = lax.broadcasted_iota(jnp.int32, xb.shape, 1)
            xb = jnp.where(t * tile_t + col < T, xb, 0.0)
            sum_ref[...] += jnp.sum(xb, axis=-1, keepdims=True)
    else:
        sum_ref[...] += jnp.sum(
            x_ref[...].astype(jnp.float32), axis=-1, keepdims=True)


def _apply_kernel(x_ref, gate_ref, o_ref):
    """Grid: (num_bc, num_t), both 'parallel'.  out = x * gate (broadcast over T)."""
    o_ref[...] = (x_ref[...].astype(jnp.float32) * gate_ref[...]).astype(o_ref.dtype)


# --------------------------------------------------------------------------- #
# Wrapper helpers
# --------------------------------------------------------------------------- #
def _default_vmem_limit_bytes():
    """Scoped-VMEM budget derived from the device (v7x has half the VMEM of v5e/v6e)."""
    try:
        cap = int(pltpu.get_tpu_info().vmem_capacity_bytes)
    except Exception:  # pragma: no cover - conservative fallback
        cap = 64 * 1024 * 1024
    return int(min(max(cap // 2, 32 * 1024 * 1024), 96 * 1024 * 1024))


def _pick_tiles(BC, T, itemsize, *, per_buf_budget=4 << 20, max_tile_t=2048,
                max_tile_bc=512):
    """Pick (tile_bc, tile_t): full extents when small, else (8,128)-aligned tiles
    sized so one buffer stays around `per_buf_budget` bytes."""
    tile_bc = BC if BC <= max_tile_bc else max_tile_bc           # ==BC or mult of 8
    if T <= max_tile_t:
        tile_t = T                                               # full T (lane-dense)
    else:
        cap = (per_buf_budget // max(tile_bc * itemsize, 1)) // 128 * 128
        tile_t = int(min(max_tile_t, max(128, cap)))             # multiple of 128
    # Guard against the 128-lane floor blowing the budget for huge bc tiles.
    while (tile_bc != BC and tile_bc > 8
           and tile_bc * tile_t * itemsize > per_buf_budget):
        tile_bc = max(8, (tile_bc // 2 + 7) // 8 * 8)
    return tile_bc, tile_t


# --------------------------------------------------------------------------- #
# Public entry point
# --------------------------------------------------------------------------- #
def se_block(x, w1, b1, w2, b2, *, max_tile_t=2048, vmem_limit_bytes=None,
             force_two_pass=False):
    """x: (B, C, T); w1: (H, C); b1: (H,); w2: (C, H); b2: (C,) -> (B, C, T)."""
    B, C, T = x.shape
    H = w1.shape[0]
    assert w1.shape == (H, C) and w2.shape == (C, H)
    assert b1.shape == (H,) and b2.shape == (C,)
    itemsize = jnp.dtype(x.dtype).itemsize
    if vmem_limit_bytes is None:
        vmem_limit_bytes = _default_vmem_limit_bytes()

    # One-time weight prep: f32, pre-transposed so in-kernel/JAX contractions are
    # in standard (m,k)x(k,n) form.
    w1t = jnp.asarray(w1, jnp.float32).T          # (C, H)
    w2t = jnp.asarray(w2, jnp.float32).T          # (H, C)
    b1r = jnp.asarray(b1, jnp.float32).reshape(1, H)
    b2r = jnp.asarray(b2, jnp.float32).reshape(1, C)

    def compiler(sem):
        return pltpu.CompilerParams(dimension_semantics=sem,
                                    vmem_limit_bytes=vmem_limit_bytes)

    # ------------------------- fused single-pass path ------------------------
    # in + out blocks double-buffered (4x) + f32 working copies (2x) + weights.
    row_bytes = C * T * itemsize
    fused_need = (4 * row_bytes + 2 * C * T * 4
                  + (2 * C * H + H + C) * 4 + (2 << 20))
    if not force_two_pass and fused_need <= vmem_limit_bytes:
        return pl.pallas_call(
            functools.partial(_fused_kernel, inv_t=1.0 / T),
            out_shape=jax.ShapeDtypeStruct((B, C, T), x.dtype),
            grid_spec=pltpu.PrefetchScalarGridSpec(
                num_scalar_prefetch=0,
                grid=(B,),
                in_specs=[
                    pl.BlockSpec((1, C, T), lambda b: (b, 0, 0)),
                    pl.BlockSpec((C, H), lambda b: (0, 0)),
                    pl.BlockSpec((1, H), lambda b: (0, 0)),
                    pl.BlockSpec((H, C), lambda b: (0, 0)),
                    pl.BlockSpec((1, C), lambda b: (0, 0)),
                ],
                out_specs=pl.BlockSpec((1, C, T), lambda b: (b, 0, 0)),
            ),
            compiler_params=compiler(("parallel",)),
        )(x, w1t, b1r, w2t, b2r)

    # ---------------------- two-pass streaming path --------------------------
    BC = B * C
    x2 = x.reshape(BC, T)                          # free contiguous reshape
    tile_bc, tile_t = _pick_tiles(BC, T, itemsize, max_tile_t=max_tile_t)
    num_bc = pl.cdiv(BC, tile_bc)
    num_t = pl.cdiv(T, tile_t)

    # Pass 1: per-(b, c) sums, accumulated directly into the resident output.
    sums = pl.pallas_call(
        functools.partial(_pool_kernel, T=T, tile_t=tile_t),
        out_shape=jax.ShapeDtypeStruct((BC, 1), jnp.float32),
        grid_spec=pltpu.PrefetchScalarGridSpec(
            num_scalar_prefetch=0,
            grid=(num_bc, num_t),
            in_specs=[pl.BlockSpec((tile_bc, tile_t), lambda bc, t: (bc, t))],
            out_specs=pl.BlockSpec((tile_bc, 1), lambda bc, t: (bc, 0)),
        ),
        compiler_params=compiler(("parallel", "arbitrary")),
    )(x2)

    # Tiny one-shot gate MLP on the pooled mean (plain JAX; few KB of work).
    mean = sums.reshape(B, C) * jnp.float32(1.0 / T)
    h = jax.nn.relu(mean @ w1t + b1r)              # (B, H)
    gate = jax.nn.sigmoid(h @ w2t + b2r)           # (B, C), f32
    gate2 = gate.reshape(BC, 1)

    # Pass 2: re-stream x and apply the channel gate (pure elementwise).
    out2 = pl.pallas_call(
        _apply_kernel,
        out_shape=jax.ShapeDtypeStruct((BC, T), x.dtype),
        grid_spec=pltpu.PrefetchScalarGridSpec(
            num_scalar_prefetch=0,
            grid=(num_bc, num_t),
            in_specs=[
                pl.BlockSpec((tile_bc, tile_t), lambda bc, t: (bc, t)),
                pl.BlockSpec((tile_bc, 1), lambda bc, t: (bc, 0)),
            ],
            out_specs=pl.BlockSpec((tile_bc, tile_t), lambda bc, t: (bc, t)),
        ),
        compiler_params=compiler(("parallel", "parallel")),
    )(x2, gate2)
    return out2.reshape(B, C, T)


def se_block_ref(x, w1, b1, w2, b2):
    """Pure-JAX reference mirroring the PyTorch forward."""
    y = jnp.mean(x, axis=-1)                       # gap + view(b, c)
    y = jax.nn.relu(y @ w1.T + b1)                 # fc1 + relu
    y = jax.nn.sigmoid(y @ w2.T + b2)              # fc2 + sigmoid
    return x * y[:, :, None]                       # expand_as + multiply


# --------------------------------------------------------------------------- #
# Demo / self-check
# --------------------------------------------------------------------------- #
if __name__ == "__main__":
    def run_case(B, C, T, reduction, *, force_two_pass=False, max_tile_t=2048):
        H = max(1, C // reduction)
        key = jax.random.PRNGKey(0)
        kx, kw1, kb1, kw2, kb2 = jax.random.split(key, 5)
        x = jax.random.normal(kx, (B, C, T), dtype=jnp.float32)
        # nn.Linear weight shapes: (out_features, in_features)
        w1 = jax.random.normal(kw1, (H, C), dtype=jnp.float32) * 0.1
        b1 = jax.random.normal(kb1, (H,), dtype=jnp.float32) * 0.1
        w2 = jax.random.normal(kw2, (C, H), dtype=jnp.float32) * 0.1
        b2 = jax.random.normal(kb2, (C,), dtype=jnp.float32) * 0.1

        out = se_block(x, w1, b1, w2, b2, force_two_pass=force_two_pass,
                       max_tile_t=max_tile_t)
        out = jax.block_until_ready(out)
        ref = se_block_ref(x, w1, b1, w2, b2)
        assert out.shape == (B, C, T)
        assert jnp.allclose(out, ref, atol=1e-4, rtol=1e-3), \
            f"mismatch vs reference for (B={B}, C={C}, T={T})"

    # Case 1: fused single-pass path (one (1, C, T) row fits VMEM easily).
    run_case(B=2, C=64, T=384, reduction=16)
    # Case 2: two-pass streaming path with T not a multiple of the tile
    #         (exercises the masked-tail reduction and the flattened apply pass).
    run_case(B=3, C=32, T=700, reduction=16, force_two_pass=True, max_tile_t=256)

    print("KERNEL_OK")
</pallas_src>

<mosaic_0001>
module attributes {stable_mosaic.version = 11 : i64} {
  func.func @_fused_kernel(%arg0: i32, %arg1: memref<1x64x384xf32, #tpu.memory_space<vmem>>, %arg2: memref<64x4xf32, #tpu.memory_space<vmem>>, %arg3: memref<1x4xf32, #tpu.memory_space<vmem>>, %arg4: memref<4x64xf32, #tpu.memory_space<vmem>>, %arg5: memref<1x64xf32, #tpu.memory_space<vmem>>, %arg6: memref<1x64x384xf32, #tpu.memory_space<vmem>>) attributes {dimension_semantics = [#tpu.dimension_semantics<parallel>], iteration_bounds = array<i64: 2>, scalar_prefetch = 0 : i64, scratch_operands = 0 : i64, tpu.core_type = #tpu.core_type<tc>, window_params = [{transform_indices = @transform_0, window_bounds = array<i64: 1, 64, 384>}, {pipeline_mode = #tpu.pipeline_mode<synchronous>, transform_indices = @transform_1, window_bounds = array<i64: 64, 4>}, {pipeline_mode = #tpu.pipeline_mode<synchronous>, transform_indices = @transform_2, window_bounds = array<i64: 1, 4>}, {pipeline_mode = #tpu.pipeline_mode<synchronous>, transform_indices = @transform_3, window_bounds = array<i64: 4, 64>}, {pipeline_mode = #tpu.pipeline_mode<synchronous>, transform_indices = @transform_4, window_bounds = array<i64: 1, 64>}, {transform_indices = @transform_5, window_bounds = array<i64: 1, 64, 384>}]} {
    %c0 = arith.constant 0 : index
    %c0_0 = arith.constant 0 : index
    %c0_1 = arith.constant 0 : index
    %0 = vector.load %arg1[%c0, %c0_0, %c0_1] : memref<1x64x384xf32, #tpu.memory_space<vmem>>, vector<1x64x384xf32>
    %cst = arith.constant dense<0.000000e+00> : vector<1x64xf32>
    %1 = vector.multi_reduction <add>, %0, %cst [2] : vector<1x64x384xf32> to vector<1x64xf32>
    %cst_2 = arith.constant 0.00260416674 : f32
    %2 = vector.broadcast %cst_2 : f32 to vector<1x64xf32>
    %3 = arith.mulf %1, %2 : vector<1x64xf32>
    %c0_3 = arith.constant 0 : index
    %c0_4 = arith.constant 0 : index
    %4 = vector.load %arg2[%c0_3, %c0_4] : memref<64x4xf32, #tpu.memory_space<vmem>>, vector<64x4xf32>
    %cst_5 = arith.constant dense<0.000000e+00> : vector<1x4xf32>
    %5 = tpu.matmul %3, %4, %cst_5 {dimension_numbers = #tpu.dot_dimension_numbers<[1], [0], [0], [1], [0, 0, 1, 1], [], []>} : vector<1x64xf32>, vector<64x4xf32>, vector<1x4xf32> -> vector<1x4xf32>
    %c0_6 = arith.constant 0 : index
    %c0_7 = arith.constant 0 : index
    %6 = vector.load %arg3[%c0_6, %c0_7] : memref<1x4xf32, #tpu.memory_space<vmem>>, vector<1x4xf32>
    %7 = arith.addf %5, %6 : vector<1x4xf32>
    %cst_8 = arith.constant 0.000000e+00 : f32
    %8 = vector.broadcast %cst_8 : f32 to vector<1x4xf32>
    %9 = arith.maximumf %7, %8 : vector<1x4xf32>
    %c0_9 = arith.constant 0 : index
    %c0_10 = arith.constant 0 : index
    %10 = vector.load %arg4[%c0_9, %c0_10] : memref<4x64xf32, #tpu.memory_space<vmem>>, vector<4x64xf32>
    %cst_11 = arith.constant dense<0.000000e+00> : vector<1x64xf32>
    %11 = tpu.matmul %9, %10, %cst_11 {dimension_numbers = #tpu.dot_dimension_numbers<[1], [0], [0], [1], [0, 0, 1, 1], [], []>} : vector<1x4xf32>, vector<4x64xf32>, vector<1x64xf32> -> vector<1x64xf32>
    %c0_12 = arith.constant 0 : index
    %c0_13 = arith.constant 0 : index
    %12 = vector.load %arg5[%c0_12, %c0_13] : memref<1x64xf32, #tpu.memory_space<vmem>>, vector<1x64xf32>
    %13 = arith.addf %11, %12 : vector<1x64xf32>
    %14 = arith.negf %13 : vector<1x64xf32>
    %15 = math.exp %14 : vector<1x64xf32>
    %cst_14 = arith.constant 1.000000e+00 : f32
    %16 = vector.broadcast %cst_14 : f32 to vector<1x64xf32>
    %17 = arith.addf %16, %15 : vector<1x64xf32>
    %18 = arith.divf %16, %17 : vector<1x64xf32>
    %19 = vector.shape_cast %18 : vector<1x64xf32> to vector<1x64x1xf32>
    %20 = vector.broadcast %19 : vector<1x64x1xf32> to vector<1x64x384xf32>
    %21 = arith.mulf %0, %20 : vector<1x64x384xf32>
    %c0_15 = arith.constant 0 : index
    %c0_16 = arith.constant 0 : index
    %c0_17 = arith.constant 0 : index
    %22 = vector.load %arg6[%c0_15, %c0_16, %c0_17] : memref<1x64x384xf32, #tpu.memory_space<vmem>>, vector<1x64x384xf32>
    tpu.vector_store %arg6[%c0_15, %c0_16, %c0_17], %21 {strides = array<i32>} : memref<1x64x384xf32, #tpu.memory_space<vmem>>, vector<1x64x384xf32>,
    return
  }
  func.func @transform_0(%arg0: i32) -> (i32, i32, i32) {
    %c0_i32 = arith.constant 0 : i32
    %c0_i32_0 = arith.constant 0 : i32
    %c0_i32_1 = arith.constant 0 : i32
    return %arg0, %c0_i32, %c0_i32_0 : i32, i32, i32
  }
  func.func @transform_1(%arg0: i32) -> (i32, i32) {
    %c0_i32 = arith.constant 0 : i32
    %c0_i32_0 = arith.constant 0 : i32
    %c0_i32_1 = arith.constant 0 : i32
    return %c0_i32, %c0_i32_0 : i32, i32
  }
  func.func @transform_2(%arg0: i32) -> (i32, i32) {
    %c0_i32 = arith.constant 0 : i32
    %c0_i32_0 = arith.constant 0 : i32
    %c0_i32_1 = arith.constant 0 : i32
    return %c0_i32, %c0_i32_0 : i32, i32
  }
  func.func @transform_3(%arg0: i32) -> (i32, i32) {
    %c0_i32 = arith.constant 0 : i32
    %c0_i32_0 = arith.constant 0 : i32
    %c0_i32_1 = arith.constant 0 : i32
    return %c0_i32, %c0_i32_0 : i32, i32
  }
  func.func @transform_4(%arg0: i32) -> (i32, i32) {
    %c0_i32 = arith.constant 0 : i32
    %c0_i32_0 = arith.constant 0 : i32
    %c0_i32_1 = arith.constant 0 : i32
    return %c0_i32, %c0_i32_0 : i32, i32
  }
  func.func @transform_5(%arg0: i32) -> (i32, i32, i32) {
    %c0_i32 = arith.constant 0 : i32
    %c0_i32_0 = arith.constant 0 : i32
    %c0_i32_1 = arith.constant 0 : i32
    return %arg0, %c0_i32, %c0_i32_0 : i32, i32, i32
  }
}

</mosaic_0001>

<llo_original>
// kernel: tpu_custom_call.1
$region0: #{tpu_custom_call.1}
  #allocation0 [shape = 'u32[]', space=smem, size = 0x4, offset = 0x4, fixed_abs, tag = 'smem constant byte address 0x4 - core index']
  #allocation1 [shape = 'u32[144,128]{1,0:T(1,128)}', space=vmem, size = 0x12000, scoped, tag = 'internal scratch']
  %s0 = inlined_call_operand.hbm [shape: f32[2,64,384], index: 0, kind: input, shape index: {}]
  %s1 = inlined_call_operand.vmem [shape: f32[64,4], index: 1, kind: input, shape index: {}]
  %s2 = inlined_call_operand.vmem [shape: f32[1,4], index: 2, kind: input, shape index: {}]
  %s3 = inlined_call_operand.vmem [shape: f32[4,64], index: 3, kind: input, shape index: {}]
  %s4 = inlined_call_operand.vmem [shape: f32[1,64], index: 4, kind: input, shape index: {}]
  %s5 = inlined_call_operand.hbm [shape: f32[2,64,384], index: 5, kind: output, shape index: {}]
  %s6 = sld [smem:[#allocation0]]
  $region57: #{tpu_custom_call.1} parent=0
    _
  %s8 = ssub.s32 1, %s6
  %s9 = scalar_select 0, %s8, %s6
  $region1: #{tpu_custom_call.1} parent=0
    #allocation2 [shape = 'u8[196608]{0}', space=vmem, size = 0x30000, scoped, tag = 'input window, operand 0']
    #allocation3 [shape = 's32[2]{0}', space=sflag, size = 0x8, scoped, tag = 'scoped memory for tpu_custom_call.1']
    #allocation4 [shape = 's32[2]{0}', space=sflag, size = 0x8, scoped, tag = 'scoped memory for tpu_custom_call.1']
    #allocation5 [shape = 'u8[196608]{0}', space=vmem, size = 0x30000, scoped, tag = 'output window, operand 0']
    %10 = vsyncpa [#allocation3], 0
    %s11 = scalar_lea.sflag [#allocation3], 1
    %12 = vsyncpa %s11, 0
    %13 = vsyncpa [#allocation4], 0
    %s14 = scalar_lea.sflag [#allocation4], 1
    %15 = vsyncpa %s14, 0
    loop: start=0, step=1, limit=4
    $region2: #{tpu_custom_call.1} parent=1 // loop_pre_header
      _
    $region3: #{tpu_custom_call.1} parent=1 // loop_header
      %s17 = sphi 0, %s21
      %p18 = scmp.ge.s32.totalorder %s17, 4
      %s27 = sphi 0, %s29
      %s30 = sphi 0, %s27
      %s31 = sphi 0, %s30
      %s47 = sphi 0, %s31
      %s51 = sphi 0, %s51
      %s53 = sphi 0, %s51
      %s54 = sphi 0, %s53
      %s68 = sphi 0, %s54
      %s72 = sphi 0, %s72
      %s74 = sphi 0, %s72
      %s75 = sphi 0, %s74
      %s89 = sphi 0, %s75
      %s93 = sphi 0, %s93
      %s95 = sphi 0, %s93
      %s96 = sphi 0, %s95
      %s110 = sphi 0, %s96
      %s114 = sphi 0, %s114
      %s116 = sphi 0, %s114
      %s117 = sphi 0, %s116
      %s131 = sphi 0, %s117
      %s137 = sphi 0, %s139
      %s140 = sphi 0, %s137
      %s141 = sphi 0, %s140
      %s157 = sphi 0, %s141
    $region4: #{tpu_custom_call.1} parent=1 // loop_header_branch
      %20 = sbr.rel (%p18) target = $region8
    $region5: #{tpu_custom_call.1} parent=1 // loop_body
      %s22 = ssub.s32 %s17, 1
      %s23 = ssub.s32 %s17, 2
      %s24 = sadd.s32 %s17, 1
      %s25 = ssub.s32 %s17, %s24
      %p26 = scmp.eq.s32.totalorder %s25, 0
      %s28 = sadd.s32 %s27, 1
      %s29 = scalar_select %p26, %s27, %s28
      %p32 = pneg %p26
      %p33 = scmp.eq.s32.totalorder %s17, 1
      %p34 = por %p32, %p33
      %p35 = scmp.ne.s32.totalorder %s27, %s30
      %p36 = scmp.eq.s32.totalorder %s17, 0
      %p37 = por %p35, %p36
      %p38 = scmp.ne.s32.totalorder %s27, %s30
      %p39 = scmp.eq.s32.totalorder %s22, 1
      %p40 = por %p38, %p39
      %p41 = scmp.ne.s32.totalorder %s30, %s31
      %p42 = scmp.eq.s32.totalorder %s22, 0
      %p43 = por %p41, %p42
      %p44 = scmp.ne.s32.totalorder %s30, %s31
      %p45 = scmp.eq.s32.totalorder %s23, 1
      %p46 = por %p44, %p45
      %p48 = scmp.ne.s32.totalorder %s31, %s47
      %p49 = scmp.eq.s32.totalorder %s23, 0
      %p50 = por %p48, %p49
      %s52 = sadd.s32 %s51, 1
      %p55 = scmp.eq.s32.totalorder %s17, 1
      %p56 = scmp.ne.s32.totalorder %s51, %s53
      %p57 = scmp.eq.s32.totalorder %s17, 0
      %p58 = por %p56, %p57
      %p59 = scmp.ne.s32.totalorder %s51, %s53
      %p60 = scmp.eq.s32.totalorder %s22, 1
      %p61 = por %p59, %p60
      %p62 = scmp.ne.s32.totalorder %s53, %s54
      %p63 = scmp.eq.s32.totalorder %s22, 0
      %p64 = por %p62, %p63
      %p65 = scmp.ne.s32.totalorder %s53, %s54
      %p66 = scmp.eq.s32.totalorder %s23, 1
      %p67 = por %p65, %p66
      %p69 = scmp.ne.s32.totalorder %s54, %s68
      %p70 = scmp.eq.s32.totalorder %s23, 0
      %p71 = por %p69, %p70
      %s73 = sadd.s32 %s72, 1
      %p76 = scmp.eq.s32.totalorder %s17, 1
      %p77 = scmp.ne.s32.totalorder %s72, %s74
      %p78 = scmp.eq.s32.totalorder %s17, 0
      %p79 = por %p77, %p78
      %p80 = scmp.ne.s32.totalorder %s72, %s74
      %p81 = scmp.eq.s32.totalorder %s22, 1
      %p82 = por %p80, %p81
      %p83 = scmp.ne.s32.totalorder %s74, %s75
      %p84 = scmp.eq.s32.totalorder %s22, 0
      %p85 = por %p83, %p84
      %p86 = scmp.ne.s32.totalorder %s74, %s75
      %p87 = scmp.eq.s32.totalorder %s23, 1
      %p88 = por %p86, %p87
      %p90 = scmp.ne.s32.totalorder %s75, %s89
      %p91 = scmp.eq.s32.totalorder %s23, 0
      %p92 = por %p90, %p91
      %s94 = sadd.s32 %s93, 1
      %p97 = scmp.eq.s32.totalorder %s17, 1
      %p98 = scmp.ne.s32.totalorder %s93, %s95
      %p99 = scmp.eq.s32.totalorder %s17, 0
      %p100 = por %p98, %p99
      %p101 = scmp.ne.s32.totalorder %s93, %s95
      %p102 = scmp.eq.s32.totalorder %s22, 1
      %p103 = por %p101, %p102
      %p104 = scmp.ne.s32.totalorder %s95, %s96
      %p105 = scmp.eq.s32.totalorder %s22, 0
      %p106 = por %p104, %p105
      %p107 = scmp.ne.s32.totalorder %s95, %s96
      %p108 = scmp.eq.s32.totalorder %s23, 1
      %p109 = por %p107, %p108
      %p111 = scmp.ne.s32.totalorder %s96, %s110
      %p112 = scmp.eq.s32.totalorder %s23, 0
      %p113 = por %p111, %p112
      %s115 = sadd.s32 %s114, 1
      %p118 = scmp.eq.s32.totalorder %s17, 1
      %p119 = scmp.ne.s32.totalorder %s114, %s116
      %p120 = scmp.eq.s32.totalorder %s17, 0
      %p121 = por %p119, %p120
      %p122 = scmp.ne.s32.totalorder %s114, %s116
      %p123 = scmp.eq.s32.totalorder %s22, 1
      %p124 = por %p122, %p123
      %p125 = scmp.ne.s32.totalorder %s116, %s117
      %p126 = scmp.eq.s32.totalorder %s22, 0
      %p127 = por %p125, %p126
      %p128 = scmp.ne.s32.totalorder %s116, %s117
      %p129 = scmp.eq.s32.totalorder %s23, 1
      %p130 = por %p128, %p129
      %p132 = scmp.ne.s32.totalorder %s117, %s131
      %p133 = scmp.eq.s32.totalorder %s23, 0
      %p134 = por %p132, %p133
      %s135 = ssub.s32 %s17, %s24
      %p136 = scmp.eq.s32.totalorder %s135, 0
      %s138 = sadd.s32 %s137, 1
      %s139 = scalar_select %p136, %s137, %s138
      %p142 = pneg %p136
      %p143 = scmp.eq.s32.totalorder %s17, 1
      %p144 = por %p142, %p143
      %p145 = scmp.ne.s32.totalorder %s137, %s140
      %p146 = scmp.eq.s32.totalorder %s17, 0
      %p147 = por %p145, %p146
      %p148 = scmp.ne.s32.totalorder %s137, %s140
      %p149 = scmp.eq.s32.totalorder %s22, 1
      %p150 = por %p148, %p149
      %p151 = scmp.ne.s32.totalorder %s140, %s141
      %p152 = scmp.eq.s32.totalorder %s22, 0
      %p153 = por %p151, %p152
      %p154 = scmp.ne.s32.totalorder %s140, %s141
      %p155 = scmp.eq.s32.totalorder %s23, 1
      %p156 = por %p154, %p155
      %p158 = scmp.ne.s32.totalorder %s141, %s157
      %p159 = scmp.eq.s32.totalorder %s23, 0
      %p160 = por %p158, %p159
      %p161 = scmp.le.s32.totalorder 1, %s17
      %p162 = scmp.lt.s32.totalorder %s17, 3
      %p163 = pnand %p161, %p162
      %p164 = pneg %p163
      // Predicated region
      $region9: #{tpu_custom_call.1} parent=5 // pred_check
        _
      $region10: #{tpu_custom_call.1} parent=5 // pred_check_branch
        %166 = sbr.rel (%p163) target = $region12
      $region11: #{tpu_custom_call.1} parent=5 // pred_region
        %s167 = ssub.s32 %s17, 1
        // Predicated region
        $region13: #{tpu_custom_call.1} parent=11 // pred_check
          %p168 = pneg %p64
        $region14: #{tpu_custom_call.1} parent=11 // pred_check_branch
          %170 = sbr.rel (%p168) target = $region16
        $region15: #{tpu_custom_call.1} parent=11 // pred_region
          _
        $region16: #{tpu_custom_call.1} parent=11 // pred_fallthru
          _
        // Predicated region
        $region17: #{tpu_custom_call.1} parent=11 // pred_check
          %p171 = pneg %p85
        $region18: #{tpu_custom_call.1} parent=11 // pred_check_branch
          %173 = sbr.rel (%p171) target = $region20
        $region19: #{tpu_custom_call.1} parent=11 // pred_region
          _
        $region20: #{tpu_custom_call.1} parent=11 // pred_fallthru
          _
        // Predicated region
        $region21: #{tpu_custom_call.1} parent=11 // pred_check
          %p174 = pneg %p106
        $region22: #{tpu_custom_call.1} parent=11 // pred_check_branch
          %176 = sbr.rel (%p174) target = $region24
        $region23: #{tpu_custom_call.1} parent=11 // pred_region
          _
        $region24: #{tpu_custom_call.1} parent=11 // pred_fallthru
          _
        // Predicated region
        $region25: #{tpu_custom_call.1} parent=11 // pred_check
          %p177 = pneg %p127
        $region26: #{tpu_custom_call.1} parent=11 // pred_check_branch
          %179 = sbr.rel (%p177) target = $region28
        $region27: #{tpu_custom_call.1} parent=11 // pred_region
          _
        $region28: #{tpu_custom_call.1} parent=11 // pred_fallthru
          _
      $region12: #{tpu_custom_call.1} parent=5 // pred_fallthru
        _
      %p180 = scmp.lt.s32.totalorder %s17, 2
      // Predicated region
      $region29: #{tpu_custom_call.1} parent=5 // pred_check
        %p181 = pneg %p180
      $region30: #{tpu_custom_call.1} parent=5 // pred_check_branch
        %183 = sbr.rel (%p181) target = $region32
      $region31: #{tpu_custom_call.1} parent=5 // pred_region
        // Predicated region
        $region33: #{tpu_custom_call.1} parent=31 // pred_check
          %p184 = pneg %p37
        $region34: #{tpu_custom_call.1} parent=31 // pred_check_branch
          %186 = sbr.rel (%p184) target = $region36
        $region35: #{tpu_custom_call.1} parent=31 // pred_region
          %s187 = sand.u32 %s27, 1
          %s188 = scalar_lea.sflag [#allocation3], %s187
          %s189 = sand.u32 %s27, 1
          %s190 = smul.addr %s189, 192
          %s191 = scalar_lea.vmem [#allocation2], %s190
          %s193 = ssub.s32 3072, 3072
          %194 = vsyncadd %s188, %s193
          %s195 = smul.addr %s17, 24
          %s196 = smul.addr %s195, 128
          %s197 = scalar_lea.hbm %s0, %s196
          %s198 = sshll.u32 %s191, 4
          %s199 = int_to_ptr.vmem [resolvable:$true] %s198
          %204 = dma.hbm_to_vmem [thread:$0]  %s197, 3072, %s199, %s188, 384, 384, 24
        $region36: #{tpu_custom_call.1} parent=31 // pred_fallthru
          _
      $region32: #{tpu_custom_call.1} parent=5 // pred_fallthru
        _
      %p205 = scmp.le.s32.totalorder 1, %s17
      %p206 = scmp.lt.s32.totalorder %s17, 3
      %p207 = pnand %p205, %p206
      %p208 = pneg %p207
      // Predicated region
      $region37: #{tpu_custom_call.1} parent=5 // pred_check
        _
      $region38: #{tpu_custom_call.1} parent=5 // pred_check_branch
        %210 = sbr.rel (%p207) target = $region40
      $region39: #{tpu_custom_call.1} parent=5 // pred_region
        %s211 = ssub.s32 %s17, 1
        %s212 = sand.u32 %s30, 1
        %s213 = scalar_lea.sflag [#allocation3], %s212
        %s214 = sand.u32 %s30, 1
        %s215 = smul.addr %s214, 192
        %s216 = scalar_lea.vmem [#allocation2], %s215
        // Predicated region
        $region41: #{tpu_custom_call.1} parent=39 // pred_check
          %p217 = pneg %p43
        $region42: #{tpu_custom_call.1} parent=39 // pred_check_branch
          %219 = sbr.rel (%p217) target = $region44
        $region43: #{tpu_custom_call.1} parent=39 // pred_region
          %220 = dma.done %s213, 3072
        $region44: #{tpu_custom_call.1} parent=39 // pred_fallthru
          _
        %s221 = sand.u32 %s30, 1
        %s222 = scalar_lea.sflag [#allocation3], %s221
        %s223 = sand.u32 %s30, 1
        %s224 = smul.addr %s223, 192
        %s225 = scalar_lea.vmem [#allocation2], %s224
        %p226 = pneg %p43
        %p227 = pneg %p40
        %p228 = pneg %p64
        %p229 = pneg %p61
        %p230 = pneg %p85
        %p231 = pneg %p82
        %p232 = pneg %p106
        %p233 = pneg %p103
        %p234 = pneg %p127
        %p235 = pneg %p124
        %p236 = pneg %p153
        %p237 = pneg %p150
        %s238 = sand.u32 %s140, 1
        %s239 = scalar_lea.sflag [#allocation4], %s238
        %s240 = sand.u32 %s140, 1
        %s241 = smul.addr %s240, 192
        %s242 = scalar_lea.vmem [#allocation5], %s241
        %v243 = vld [vmem:[%s216] sm:$0xff]
        %v244 = vld [vmem:[%s216 + $0x8] sm:$0xff]
        %v245 = vld [vmem:[%s216 + $0x10] sm:$0xff]
        %v246 = vld [vmem:[%s216 + $0x18] sm:$0xff]
        %v247 = vld [vmem:[%s216 + $0x20] sm:$0xff]
        %v248 = vld [vmem:[%s216 + $0x28] sm:$0xff]
        %v249 = vld [vmem:[%s216 + $0x30] sm:$0xff]
        %v250 = vld [vmem:[%s216 + $0x38] sm:$0xff]
        %v251 = vld [vmem:[%s216 + $0x40] sm:$0xff]
        %v252 = vld [vmem:[%s216 + $0x48] sm:$0xff]
        %v253 = vld [vmem:[%s216 + $0x50] sm:$0xff]
        %v254 = vld [vmem:[%s216 + $0x58] sm:$0xff]
        %v255 = vld [vmem:[%s216 + $0x60] sm:$0xff]
        %v256 = vld [vmem:[%s216 + $0x68] sm:$0xff]
        %v257 = vld [vmem:[%s216 + $0x70] sm:$0xff]
        %v258 = vld [vmem:[%s216 + $0x78] sm:$0xff]
        %v259 = vld [vmem:[%s216 + $0x80] sm:$0xff]
        %v260 = vld [vmem:[%s216 + $0x88] sm:$0xff]
        %v261 = vld [vmem:[%s216 + $0x90] sm:$0xff]
        %v262 = vld [vmem:[%s216 + $0x98] sm:$0xff]
        %v263 = vld [vmem:[%s216 + $0xa0] sm:$0xff]
        %v264 = vld [vmem:[%s216 + $0xa8] sm:$0xff]
        %v265 = vld [vmem:[%s216 + $0xb0] sm:$0xff]
        %v266 = vld [vmem:[%s216 + $0xb8] sm:$0xff]
        %v267 = vadd.f32 %v243, %v244
        %v268 = vadd.f32 %v267, %v245
        %269 = vadd.xlane.f32.xlu0 %v268
        %v270 = vpop.xlane.xlu0 %269
        %v271 = vadd.f32 %v246, %v247
        %v272 = vadd.f32 %v271, %v248
        %273 = vadd.xlane.f32.xlu0 %v272
        %v274 = vpop.xlane.xlu0 %273
        %v275 = vadd.f32 %v249, %v250
        %v276 = vadd.f32 %v275, %v251
        %277 = vadd.xlane.f32.xlu0 %v276
        %v278 = vpop.xlane.xlu0 %277
        %v279 = vadd.f32 %v252, %v253
        %v280 = vadd.f32 %v279, %v254
        %281 = vadd.xlane.f32.xlu0 %v280
        %v282 = vpop.xlane.xlu0 %281
        %v283 = vadd.f32 %v255, %v256
        %v284 = vadd.f32 %v283, %v257
        %285 = vadd.xlane.f32.xlu0 %v284
        %v286 = vpop.xlane.xlu0 %285
        %v287 = vadd.f32 %v258, %v259
        %v288 = vadd.f32 %v287, %v260
        %289 = vadd.xlane.f32.xlu0 %v288
        %v290 = vpop.xlane.xlu0 %289
        %v291 = vadd.f32 %v261, %v262
        %v292 = vadd.f32 %v291, %v263
        %293 = vadd.xlane.f32.xlu0 %v292
        %v294 = vpop.xlane.xlu0 %293
        %v295 = vadd.f32 %v264, %v265
        %v296 = vadd.f32 %v295, %v266
        %297 = vadd.xlane.f32.xlu0 %v296
        %v298 = vpop.xlane.xlu0 %297
        %v299 = vmul.f32 %v270, 0.0026041667
        %v300 = vmul.f32 %v274, 0.0026041667
        %v301 = vmul.f32 %v278, 0.0026041667
        %v302 = vmul.f32 %v282, 0.0026041667
        %v303 = vmul.f32 %v286, 0.0026041667
        %v304 = vmul.f32 %v290, 0.0026041667
        %v305 = vmul.f32 %v294, 0.0026041667
        %v306 = vmul.f32 %v298, 0.0026041667
        %v307 = vld [vmem:[%s1] sm:$0xff]
        %v308 = vld [vmem:[%s1 + $0x8] sm:$0xff]
        %v309 = vld [vmem:[%s1 + $0x10] sm:$0xff]
        %v310 = vld [vmem:[%s1 + $0x18] sm:$0xff]
        %v311 = vld [vmem:[%s1 + $0x20] sm:$0xff]
        %v312 = vld [vmem:[%s1 + $0x28] sm:$0xff]
        %v313 = vld [vmem:[%s1 + $0x30] sm:$0xff]
        %v314 = vld [vmem:[%s1 + $0x38] sm:$0xff]
        %v315 = vld [vmem:[%s2] sm:$0x1]
        %v324 = vlaneseq
        %v325 = vand.u32 %v324, 127
        %v326 = vlaneseq
        %v327 = vshrl.u32 %v326, 7
        %v328 = vsub.s32 %v325, %v327
        %v329 = vrot.slane %v299, %v328
        %v330 = vadd.s32 %v325, 4294967288
        %v331 = vlaneseq
        %v332 = vshrl.u32 %v331, 7
        %v333 = vsub.s32 %v330, %v332
        %v334 = vrot.slane %v300, %v333
        %vm335 = vcmask 130112
        %v336 = vsel %vm335, %v334, %v329
        %v337 = vadd.s32 %v325, 4294967280
        %v338 = vlaneseq
        %v339 = vshrl.u32 %v338, 7
        %v340 = vsub.s32 %v337, %v339
        %v341 = vrot.slane %v301, %v340
        %vm342 = vcmask 195712
        %v343 = vsel %vm342, %v341, %v336
        %v344 = vadd.s32 %v325, 4294967272
        %v345 = vlaneseq
        %v346 = vshrl.u32 %v345, 7
        %v347 = vsub.s32 %v344, %v346
        %v348 = vrot.slane %v302, %v347
        %vm349 = vcmask 261312
        %v350 = vsel %vm349, %v348, %v343
        %v351 = vadd.s32 %v325, 4294967264
        %v352 = vlaneseq
        %v353 = vshrl.u32 %v352, 7
        %v354 = vsub.s32 %v351, %v353
        %v355 = vrot.slane %v303, %v354
        %vm356 = vcmask 326912
        %v357 = vsel %vm356, %v355, %v350
        %v358 = vadd.s32 %v325, 4294967256
        %v359 = vlaneseq
        %v360 = vshrl.u32 %v359, 7
        %v361 = vsub.s32 %v358, %v360
        %v362 = vrot.slane %v304, %v361
        %vm363 = vcmask 392512
        %v364 = vsel %vm363, %v362, %v357
        %v365 = vadd.s32 %v325, 4294967248
        %v366 = vlaneseq
        %v367 = vshrl.u32 %v366, 7
        %v368 = vsub.s32 %v365, %v367
        %v369 = vrot.slane %v305, %v368
        %vm370 = vcmask 458112
        %v371 = vsel %vm370, %v369, %v364
        %v372 = vadd.s32 %v325, 4294967240
        %v373 = vlaneseq
        %v374 = vshrl.u32 %v373, 7
        %v375 = vsub.s32 %v372, %v374
        %v376 = vrot.slane %v306, %v375
        %vm377 = vcmask 523712
        %v378 = vsel %vm377, %v376, %v371
        %vm379 = vcmask 523264
        %v380 = vsel %vm379, %v378, 0
        %382 = vmatprep.subr.mxu0 0.0
        %383 = vmatpush1.msra.mxu0 %v307
        %384 = vmatprep.subr.mxu0 0.0
        %385 = vmatpush1.msra.mxu0 %v308
        %386 = vmatprep.subr.mxu0 0.0
        %387 = vmatpush1.msra.mxu0 %v309
        %388 = vmatprep.subr.mxu0 0.0
        %389 = vmatpush1.msra.mxu0 %v310
        %390 = vmatprep.subr.mxu0 0.0
        %391 = vmatpush1.msra.mxu0 %v311
        %392 = vmatprep.subr.mxu0 0.0
        %393 = vmatpush1.msra.mxu0 %v312
        %394 = vmatprep.subr.mxu0 0.0
        %395 = vmatpush1.msra.mxu0 %v313
        %396 = vmatprep.subr.mxu0 0.0
        %397 = vmatpush1.msra.mxu0 %v314
        %398 = vmatprep.subr.mxu0 0.0
        %399 = vmatpush1.msra.mxu0 0.0
        %400 = vmatprep.subr.mxu0 0.0
        %401 = vmatpush1.msra.mxu0 0.0
        %402 = vmatprep.subr.mxu0 0.0
        %403 = vmatpush1.msra.mxu0 0.0
        %404 = vmatprep.subr.mxu0 0.0
        %405 = vmatpush1.msra.mxu0 0.0
        %406 = vmatprep.subr.mxu0 0.0
        %407 = vmatpush1.msra.mxu0 0.0
        %408 = vmatprep.subr.mxu0 0.0
        %409 = vmatpush1.msra.mxu0 0.0
        %410 = vmatprep.subr.mxu0 0.0
        %411 = vmatpush1.msra.mxu0 0.0
        %412 = vmatprep.subr.mxu0 0.0
        %413 = vmatpush1.msra.mxu0 0.0
        %414 = vmatprep.subr.mxu0 0.0
        %415 = vmatpush1.msra.mxu0 0.0
        %416 = vmatprep.subr.mxu0 0.0
        %417 = vmatpush1.msra.mxu0 0.0
        %418 = vmatprep.subr.mxu0 0.0
        %419 = vmatpush1.msra.mxu0 0.0
        %420 = vmatprep.subr.mxu0 0.0
        %421 = vmatpush1.msra.mxu0 0.0
        %422 = vmatprep.subr.mxu0 0.0
        %423 = vmatpush1.msra.mxu0 0.0
        %424 = vmatprep.subr.mxu0 0.0
        %425 = vmatpush1.msra.mxu0 0.0
        %426 = vmatprep.subr.mxu0 0.0
        %427 = vmatpush1.msra.mxu0 0.0
        %428 = vmatprep.subr.mxu0 0.0
        %429 = vmatpush1.msra.mxu0 0.0
        %430 = vmatprep.subr.mxu0 0.0
        %431 = vmatpush1.msra.mxu0 0.0
        %432 = vmatprep.subr.mxu0 0.0
        %433 = vmatpush1.msra.mxu0 0.0
        %434 = vmatprep.subr.mxu0 0.0
        %435 = vmatpush1.msra.mxu0 0.0
        %436 = vmatprep.subr.mxu0 0.0
        %437 = vmatpush1.msra.mxu0 0.0
        %438 = vmatprep.subr.mxu0 0.0
        %439 = vmatpush1.msra.mxu0 0.0
        %440 = vmatprep.subr.mxu0 0.0
        %441 = vmatpush1.msra.mxu0 0.0
        %442 = vmatprep.subr.mxu0 0.0
        %443 = vmatpush1.msra.mxu0 0.0
        %444 = vmatprep.subr.mxu0 0.0
        %445 = vmatpush1.msra.mxu0 0.0
        %446 = vmatprep.mubr.f32.mxu0 0.0
        %447 = vmatmul.mubr.f32.gmra.mrb[0].mxu0 %v380
        %v448 = vpop.f32.mrb[0].mxu0
        %v449 = vadd.f32 %v315, %v448
        %v450 = vpop.f32.mrb[0].mxu0
        %451 = vdwg.mxu0
        %v452 = vmax.f32 %v449, 0.0
        %v453 = vld [vmem:[%s3] sm:$0xf]
        %v454 = vld [vmem:[%s4] sm:$0x1]
        %vm455 = vcmask 31744
        %v457 = vsel %vm455, %v452, 0
        %vm459 = vcmask 1043456
        %v461 = vsel %vm459, %v453, 0
        %463 = vmatprep.subr.mxu0 0.0
        %464 = vmatpush1.msra.mxu0 %v461
        %465 = vmatprep.subr.mxu0 0.0
        %466 = vmatpush1.msra.mxu0 0.0
        %467 = vmatprep.subr.mxu0 0.0
        %468 = vmatpush1.msra.mxu0 0.0
        %469 = vmatprep.subr.mxu0 0.0
        %470 = vmatpush1.msra.mxu0 0.0
        %471 = vmatprep.subr.mxu0 0.0
        %472 = vmatpush1.msra.mxu0 0.0
        %473 = vmatprep.subr.mxu0 0.0
        %474 = vmatpush1.msra.mxu0 0.0
        %475 = vmatprep.subr.mxu0 0.0
        %476 = vmatpush1.msra.mxu0 0.0
        %477 = vmatprep.subr.mxu0 0.0
        %478 = vmatpush1.msra.mxu0 0.0
        %479 = vmatprep.subr.mxu0 0.0
        %480 = vmatpush1.msra.mxu0 0.0
        %481 = vmatprep.subr.mxu0 0.0
        %482 = vmatpush1.msra.mxu0 0.0
        %483 = vmatprep.subr.mxu0 0.0
        %484 = vmatpush1.msra.mxu0 0.0
        %485 = vmatprep.subr.mxu0 0.0
        %486 = vmatpush1.msra.mxu0 0.0
        %487 = vmatprep.subr.mxu0 0.0
        %488 = vmatpush1.msra.mxu0 0.0
        %489 = vmatprep.subr.mxu0 0.0
        %490 = vmatpush1.msra.mxu0 0.0
        %491 = vmatprep.subr.mxu0 0.0
        %492 = vmatpush1.msra.mxu0 0.0
        %493 = vmatprep.subr.mxu0 0.0
        %494 = vmatpush1.msra.mxu0 0.0
        %495 = vmatprep.subr.mxu0 0.0
        %496 = vmatpush1.msra.mxu0 0.0
        %497 = vmatprep.subr.mxu0 0.0
        %498 = vmatpush1.msra.mxu0 0.0
        %499 = vmatprep.subr.mxu0 0.0
        %500 = vmatpush1.msra.mxu0 0.0
        %501 = vmatprep.subr.mxu0 0.0
        %502 = vmatpush1.msra.mxu0 0.0
        %503 = vmatprep.subr.mxu0 0.0
        %504 = vmatpush1.msra.mxu0 0.0
        %505 = vmatprep.subr.mxu0 0.0
        %506 = vmatpush1.msra.mxu0 0.0
        %507 = vmatprep.subr.mxu0 0.0
        %508 = vmatpush1.msra.mxu0 0.0
        %509 = vmatprep.subr.mxu0 0.0
        %510 = vmatpush1.msra.mxu0 0.0
        %511 = vmatprep.subr.mxu0 0.0
        %512 = vmatpush1.msra.mxu0 0.0
        %513 = vmatprep.subr.mxu0 0.0
        %514 = vmatpush1.msra.mxu0 0.0
        %515 = vmatprep.subr.mxu0 0.0
        %516 = vmatpush1.msra.mxu0 0.0
        %517 = vmatprep.subr.mxu0 0.0
        %518 = vmatpush1.msra.mxu0 0.0
        %519 = vmatprep.subr.mxu0 0.0
        %520 = vmatpush1.msra.mxu0 0.0
        %521 = vmatprep.subr.mxu0 0.0
        %522 = vmatpush1.msra.mxu0 0.0
        %523 = vmatprep.subr.mxu0 0.0
        %524 = vmatpush1.msra.mxu0 0.0
        %525 = vmatprep.subr.mxu0 0.0
        %526 = vmatpush1.msra.mxu0 0.0
        %527 = vmatprep.mubr.f32.mxu0 0.0
        %528 = vmatmul.mubr.f32.gmra.mrb[0].mxu0 %v457
        %v529 = vpop.f32.mrb[0].mxu0
        %v530 = vadd.f32 %v454, %v529
        %v531 = vpop.f32.mrb[0].mxu0
        %532 = vdwg.mxu0
        %v533 = vxor.u32 %v530, 2147483648
        %v534 = vmul.f32 %v533, 1.442695
        %v535 = vpow.pop %v534
        %v536 = vadd.f32 %v535, 1.0
        %v537 = vrcp.pop %v536
        %v538 = vmul.f32 1.0, %v537
        %v539 = vlaneseq
        %v540 = vshrl.u32 %v539, 7
        %v541 = vsub.s32 0, %v540
        %v542 = vrot.slane %v538, %v541
        %544 = vbcast.lane.b32.xlu0 %v542, 256
        %v545 = vpop.permute.xlu0 %544
        %s547 = sor.u32 256, 8
        %548 = vbcast.lane.b32.xlu0 %v542, %s547
        %v549 = vpop.permute.xlu0 %548
        %s551 = sor.u32 256, 16
        %552 = vbcast.lane.b32.xlu0 %v542, %s551
        %v553 = vpop.permute.xlu0 %552
        %s555 = sor.u32 256, 24
        %556 = vbcast.lane.b32.xlu0 %v542, %s555
        %v557 = vpop.permute.xlu0 %556
        %s559 = sor.u32 256, 32
        %560 = vbcast.lane.b32.xlu0 %v542, %s559
        %v561 = vpop.permute.xlu0 %560
        %s563 = sor.u32 256, 40
        %564 = vbcast.lane.b32.xlu0 %v542, %s563
        %v565 = vpop.permute.xlu0 %564
        %s567 = sor.u32 256, 48
        %568 = vbcast.lane.b32.xlu0 %v542, %s567
        %v569 = vpop.permute.xlu0 %568
        %s571 = sor.u32 256, 56
        %572 = vbcast.lane.b32.xlu0 %v542, %s571
        %v573 = vpop.permute.xlu0 %572
        %v574 = vmul.f32 %v243, %v545
        %v575 = vmul.f32 %v244, %v545
        %v576 = vmul.f32 %v245, %v545
        %v577 = vmul.f32 %v246, %v549
        %v578 = vmul.f32 %v247, %v549
        %v579 = vmul.f32 %v248, %v549
        %v580 = vmul.f32 %v249, %v553
        %v581 = vmul.f32 %v250, %v553
        %v582 = vmul.f32 %v251, %v553
        %v583 = vmul.f32 %v252, %v557
        %v584 = vmul.f32 %v253, %v557
        %v585 = vmul.f32 %v254, %v557
        %v586 = vmul.f32 %v255, %v561
        %v587 = vmul.f32 %v256, %v561
        %v588 = vmul.f32 %v257, %v561
        %v589 = vmul.f32 %v258, %v565
        %v590 = vmul.f32 %v259, %v565
        %v591 = vmul.f32 %v260, %v565
        %v592 = vmul.f32 %v261, %v569
        %v593 = vmul.f32 %v262, %v569
        %v594 = vmul.f32 %v263, %v569
        %v595 = vmul.f32 %v264, %v573
        %v596 = vmul.f32 %v265, %v573
        %v597 = vmul.f32 %v266, %v573
        %598 = vst [vmem:[%s242] sm:$0xff] %v574
        %599 = vst [vmem:[%s242 + $0x8] sm:$0xff] %v575
        %600 = vst [vmem:[%s242 + $0x10] sm:$0xff] %v576
        %601 = vst [vmem:[%s242 + $0x18] sm:$0xff] %v577
        %602 = vst [vmem:[%s242 + $0x20] sm:$0xff] %v578
        %603 = vst [vmem:[%s242 + $0x28] sm:$0xff] %v579
        %604 = vst [vmem:[%s242 + $0x30] sm:$0xff] %v580
        %605 = vst [vmem:[%s242 + $0x38] sm:$0xff] %v581
        %606 = vst [vmem:[%s242 + $0x40] sm:$0xff] %v582
        %607 = vst [vmem:[%s242 + $0x48] sm:$0xff] %v583
        %608 = vst [vmem:[%s242 + $0x50] sm:$0xff] %v584
        %609 = vst [vmem:[%s242 + $0x58] sm:$0xff] %v585
        %610 = vst [vmem:[%s242 + $0x60] sm:$0xff] %v586
        %611 = vst [vmem:[%s242 + $0x68] sm:$0xff] %v587
        %612 = vst [vmem:[%s242 + $0x70] sm:$0xff] %v588
        %613 = vst [vmem:[%s242 + $0x78] sm:$0xff] %v589
        %614 = vst [vmem:[%s242 + $0x80] sm:$0xff] %v590
        %615 = vst [vmem:[%s242 + $0x88] sm:$0xff] %v591
        %616 = vst [vmem:[%s242 + $0x90] sm:$0xff] %v592
        %617 = vst [vmem:[%s242 + $0x98] sm:$0xff] %v593
        %618 = vst [vmem:[%s242 + $0xa0] sm:$0xff] %v594
        %619 = vst [vmem:[%s242 + $0xa8] sm:$0xff] %v595
        %620 = vst [vmem:[%s242 + $0xb0] sm:$0xff] %v596
        %621 = vst [vmem:[%s242 + $0xb8] sm:$0xff] %v597
        %s622 = sand.u32 %s140, 1
        %s623 = scalar_lea.sflag [#allocation4], %s622
        %s624 = sand.u32 %s140, 1
        %s625 = smul.addr %s624, 192
        %s626 = scalar_lea.vmem [#allocation5], %s625
        // Predicated region
        $region45: #{tpu_custom_call.1} parent=39 // pred_check
          %p627 = pneg %p150
        $region46: #{tpu_custom_call.1} parent=39 // pred_check_branch
          %629 = sbr.rel (%p627) target = $region48
        $region47: #{tpu_custom_call.1} parent=39 // pred_region
          %s631 = ssub.s32 3072, 3072
          %632 = vsyncadd %s623, %s631
          %s633 = smul.addr %s22, 24
          %s634 = smul.addr %s633, 128
          %s635 = scalar_lea.hbm %s5, %s634
          %s636 = sshll.u32 %s626, 4
          %s637 = int_to_ptr.vmem [resolvable:$true] %s636
          %642 = dma.vmem_to_hbm [thread:$0]  %s637, 3072, %s635, %s623, 384, 384, 24
        $region48: #{tpu_custom_call.1} parent=39 // pred_fallthru
          _
      $region40: #{tpu_custom_call.1} parent=5 // pred_fallthru
        _
      %p643 = scmp.le.s32.totalorder 2, %s17
      // Predicated region
      $region49: #{tpu_custom_call.1} parent=5 // pred_check
        %p644 = pneg %p643
      $region50: #{tpu_custom_call.1} parent=5 // pred_check_branch
        %646 = sbr.rel (%p644) target = $region52
      $region51: #{tpu_custom_call.1} parent=5 // pred_region
        %s647 = ssub.s32 %s17, 2
        // Predicated region
        $region53: #{tpu_custom_call.1} parent=51 // pred_check
          %p648 = pneg %p156
        $region54: #{tpu_custom_call.1} parent=51 // pred_check_branch
          %650 = sbr.rel (%p648) target = $region56
        $region55: #{tpu_custom_call.1} parent=51 // pred_region
          %s651 = sand.u32 %s141, 1
          %s652 = scalar_lea.sflag [#allocation4], %s651
          %s653 = sand.u32 %s141, 1
          %s654 = smul.addr %s653, 192
          %s655 = scalar_lea.vmem [#allocation5], %s654
          %656 = dma.done %s652, 3072
        $region56: #{tpu_custom_call.1} parent=51 // pred_fallthru
          _
      $region52: #{tpu_custom_call.1} parent=5 // pred_fallthru
        _
    $region6: #{tpu_custom_call.1} parent=1 // loop_footer
      %s21 = sadd.s32 1, %s17
    $region7: #{tpu_custom_call.1} parent=1 // loop_footer_branch
      %16 = sbr.rel target = $region3
    $region8: #{tpu_custom_call.1} parent=1 // loop_exit
      _
    %657 = vsyncpa [#allocation3], 1
    %s658 = scalar_lea.sflag [#allocation3], 1
    %659 = vsyncpa %s658, 1
    %660 = vsyncpa [#allocation4], 1
    %s661 = scalar_lea.sflag [#allocation4], 1
    %662 = vsyncpa %s661, 1

</llo_original>
